<compile_context>
chip_gen: v5e
topology: v5e:2x2
jax: 0.10.0
libtpu: 0.0.40
codegen_flags: <defaults>
</compile_context>

<pallas_src>
import jax
import jax.numpy as jnp
from jax.experimental import pallas as pl
from jax.experimental.pallas import tpu as pltpu


def _round_up(x, m):
    return ((x + m - 1) // m) * m


def pack_params(params, *, lane_pad=128):
    """Pack [w1,b1,w2,b2,...] into one bf16 (rows, >=128) array with aligned blocks.

    Layer l occupies an 8-row-aligned block:
        rows [off, off + in_l)          : W_l (in_l, out_l), zero-padded to a multiple of 8 rows
        row  [off + round_up8(in_l)]    : b_l (1, out_l)            (own 8-row slab)
    so every in-kernel slice starts on a sublane boundary.  Columns are zero-padded to 128.
    Returns (packed, [(w_row_start, bias_row), ...]).
    """
    num_layers = len(params) // 2
    max_out = max(int(params[2 * l].shape[1]) for l in range(num_layers))
    col = max(lane_pad, _round_up(max_out, 128))
    blocks, row_offs = [], []
    r = 0
    for l in range(num_layers):
        w = jnp.asarray(params[2 * l], jnp.float32)
        b = jnp.asarray(params[2 * l + 1], jnp.float32).reshape(1, -1)
        din, dout = int(w.shape[0]), int(w.shape[1])
        w_rows = _round_up(din, 8)
        blk_rows = w_rows + 8  # 8-row bias slab keeps the next block 8-aligned too
        blk = jnp.zeros((blk_rows, col), jnp.float32)
        blk = blk.at[:din, :dout].set(w)
        blk = blk.at[w_rows, :dout].set(b[0])
        blocks.append(blk.astype(jnp.bfloat16))
        row_offs.append((r, r + w_rows))
        r += blk_rows
    return jnp.concatenate(blocks, axis=0), row_offs


def make_mlp_kernel(dims, row_offs):
    """MLP on one (tb, in_dim) tile: bf16 MXU operands, f32 accumulate/elementwise."""
    num_layers = len(dims) - 1

    def kernel(x_ref, p_ref, out_ref):
        f32, bf16 = jnp.float32, jnp.bfloat16
        # Wrapper already fused concat([theta, y, t/T]) into x; cast at the dot operand
        # only (bias-add / ReLU stay f32: v5e VPU/EUP have no bf16).
        h = x_ref[...].astype(bf16)
        for l in range(num_layers):
            w_off, b_off = row_offs[l]
            din, dout = dims[l], dims[l + 1]
            w = p_ref[w_off : w_off + din, 0:dout]              # bf16 (din, dout), aligned view
            b = p_ref[b_off : b_off + 1, 0:dout].astype(f32)    # f32  (1,  dout)
            z = jnp.dot(h, w, preferred_element_type=f32) + b   # one MXU pass per layer
            if l + 1 < num_layers:
                h = jnp.maximum(z, 0.0).astype(bf16)
            else:
                out_ref[...] = z.astype(out_ref.dtype)

    return kernel


def diffusion_mlp_forward(theta, y, t, params, num_timesteps, *, batch_tile=2048):
    """Pallas equivalent of LinearConditionalDiffusionModel.forward."""
    N, theta_dim = theta.shape
    y_dim = y.shape[1]
    num_layers = len(params) // 2
    assert num_layers >= 2, "module requires a non-empty layer_sizes (at least one hidden layer)"
    layer_sizes = [int(params[2 * l].shape[1]) for l in range(num_layers - 1)]
    in_dim = theta_dim + y_dim + 1
    dims = [in_dim] + layer_sizes + [theta_dim]

    # Fuse concat + time scaling in the wrapper: one (N, in_dim) activation block lets
    # layer 1 run as a single MXU pass instead of a split theta/y/t matmul.
    x = jnp.concatenate(
        [
            theta.astype(jnp.float32),
            y.astype(jnp.float32),
            t.reshape(N, 1).astype(jnp.float32) * (1.0 / float(num_timesteps)),
        ],
        axis=-1,
    )

    packed, row_offs = pack_params(params)

    # Batch tile: large default amortizes per-step overhead; capped to ~ceil(N/4) rows
    # (rounded to a multiple of 8) so the grid has several steps -> v7x's two
    # TensorCores can both be used via dimension_semantics=("parallel",).
    tb = min(int(batch_tile), _round_up(pl.cdiv(N, 4), 8))
    tb = max(8, min(tb, _round_up(N, 8)))
    grid = (pl.cdiv(N, tb),)

    kernel = make_mlp_kernel(dims, row_offs)

    in_specs = [
        pl.BlockSpec((tb, in_dim), lambda i: (i, 0)),
        # Constant block index => packed params are DMA'd once and stay resident in VMEM.
        pl.BlockSpec(packed.shape, lambda i: (0, 0)),
    ]
    out_spec = pl.BlockSpec((tb, theta_dim), lambda i: (i, 0))

    # TODO(synk): a transposed (feature, batch) layout would make the (tb, theta_dim=3)
    # output store lane-dense; skipped since the MXU pass count, not the store count,
    # dominates at these widths.  Likewise pipeline_mode=pl.Buffered(3) on the x spec is
    # only worth adding if an xprof trace shows exposed input DMA.
    return pl.pallas_call(
        kernel,
        out_shape=jax.ShapeDtypeStruct((N, theta_dim), jnp.float32),
        grid_spec=pltpu.PrefetchScalarGridSpec(
            num_scalar_prefetch=0,
            grid=grid,
            in_specs=in_specs,
            out_specs=out_spec,
        ),
        compiler_params=pltpu.CompilerParams(dimension_semantics=("parallel",)),
    )(x, packed)


def _reference_forward_f32(theta, y, t, params, num_timesteps):
    """Pure-JAX f32 reference (mirrors the PyTorch forward)."""
    t_expanded = t[:, None].astype(jnp.float32) / float(num_timesteps)
    h = jnp.concatenate(
        [theta.astype(jnp.float32), y.astype(jnp.float32), t_expanded], axis=-1
    )
    num_layers = len(params) // 2
    for l in range(num_layers - 1):
        h = jnp.maximum(h @ params[2 * l] + params[2 * l + 1], 0.0)
    return h @ params[-2] + params[-1]


def _reference_forward_bf16(theta, y, t, params, num_timesteps):
    """Reference mirroring the kernel's numerics (bf16 dot operands, f32 accumulate)."""
    t_expanded = t[:, None].astype(jnp.float32) / float(num_timesteps)
    h = jnp.concatenate(
        [theta.astype(jnp.float32), y.astype(jnp.float32), t_expanded], axis=-1
    )
    num_layers = len(params) // 2
    for l in range(num_layers):
        w = params[2 * l].astype(jnp.bfloat16)
        b = params[2 * l + 1].astype(jnp.bfloat16).astype(jnp.float32).reshape(1, -1)
        z = jnp.dot(h.astype(jnp.bfloat16), w, preferred_element_type=jnp.float32) + b
        h = jnp.maximum(z, 0.0) if l + 1 < num_layers else z
    return h


if __name__ == "__main__":
    # Small shapes consistent with the module.
    theta_dim = 3
    y_dim = 4
    layer_sizes = [32, 32]
    num_timesteps = 100
    N = 20  # not a multiple of the tile -> exercises the padded tail block

    key = jax.random.PRNGKey(0)

    # Deterministic parameter init (matches nn.Linear's U(-1/sqrt(fan_in), 1/sqrt(fan_in))).
    dims = [theta_dim + y_dim + 1] + list(layer_sizes) + [theta_dim]
    params = []
    for i in range(len(dims) - 1):
        key, kw, kb = jax.random.split(key, 3)
        bound = 1.0 / (dims[i] ** 0.5)
        w = jax.random.uniform(kw, (dims[i], dims[i + 1]), jnp.float32, -bound, bound)
        b = jax.random.uniform(kb, (1, dims[i + 1]), jnp.float32, -bound, bound)
        params += [w, b]

    key, k_theta, k_y, k_t = jax.random.split(key, 4)
    theta = jax.random.normal(k_theta, (N, theta_dim), jnp.float32)
    y = jax.random.normal(k_y, (N, y_dim), jnp.float32)
    t = jax.random.randint(k_t, (N,), 0, num_timesteps)

    ref_bf16 = _reference_forward_bf16(theta, y, t, params, num_timesteps)
    ref_f32 = _reference_forward_f32(theta, y, t, params, num_timesteps)

    # Small batch: tile caps to a few-step grid (exercises tiling + tail padding).
    out = jax.block_until_ready(diffusion_mlp_forward(theta, y, t, params, num_timesteps))
    assert out.shape == (N, theta_dim)
    assert jnp.allclose(out, ref_bf16, atol=1e-4, rtol=1e-4), "mismatch vs bf16 reference"
    assert jnp.allclose(out, ref_f32, atol=5e-2, rtol=5e-2), "mismatch vs f32 reference"

    # Larger batch with the default 2048-row tile (multi-step grid).
    N2 = 4096
    key, k2a, k2b, k2c = jax.random.split(key, 4)
    theta2 = jax.random.normal(k2a, (N2, theta_dim), jnp.float32)
    y2 = jax.random.normal(k2b, (N2, y_dim), jnp.float32)
    t2 = jax.random.randint(k2c, (N2,), 0, num_timesteps)
    out2 = jax.block_until_ready(
        diffusion_mlp_forward(theta2, y2, t2, params, num_timesteps)
    )
    ref2 = _reference_forward_bf16(theta2, y2, t2, params, num_timesteps)
    assert jnp.allclose(out2, ref2, atol=1e-4, rtol=1e-4), "mismatch (large batch)"

    print("KERNEL_OK")
</pallas_src>

<mosaic_0001>
module attributes {stable_mosaic.version = 11 : i64} {
  func.func @kernel(%arg0: i32, %arg1: memref<8x8xf32, #tpu.memory_space<vmem>>, %arg2: memref<96x128xbf16, #tpu.memory_space<vmem>>, %arg3: memref<8x3xf32, #tpu.memory_space<vmem>>) attributes {dimension_semantics = [#tpu.dimension_semantics<parallel>], iteration_bounds = array<i64: 3>, scalar_prefetch = 0 : i64, scratch_operands = 0 : i64, tpu.core_type = #tpu.core_type<tc>, window_params = [{transform_indices = @transform_0, window_bounds = array<i64: 8, 8>}, {pipeline_mode = #tpu.pipeline_mode<synchronous>, transform_indices = @transform_1, window_bounds = array<i64: 96, 128>}, {transform_indices = @transform_2, window_bounds = array<i64: 8, 3>}]} {
    %c0 = arith.constant 0 : index
    %c0_0 = arith.constant 0 : index
    %0 = vector.load %arg1[%c0, %c0_0] : memref<8x8xf32, #tpu.memory_space<vmem>>, vector<8x8xf32>
    %1 = arith.truncf %0 : vector<8x8xf32> to vector<8x8xbf16>
    %c0_1 = arith.constant 0 : index
    %c0_2 = arith.constant 0 : index
    %2 = vector.load %arg2[%c0_1, %c0_2] : memref<96x128xbf16, #tpu.memory_space<vmem>>, vector<8x32xbf16>
    %c8 = arith.constant 8 : index
    %c0_3 = arith.constant 0 : index
    %3 = vector.load %arg2[%c8, %c0_3] : memref<96x128xbf16, #tpu.memory_space<vmem>>, vector<1x32xbf16>
    %4 = arith.extf %3 : vector<1x32xbf16> to vector<1x32xf32>
    %cst = arith.constant dense<0.000000e+00> : vector<8x32xf32>
    %5 = tpu.matmul %1, %2, %cst {dimension_numbers = #tpu.dot_dimension_numbers<[1], [0], [0], [1], [0, 0, 1, 1], [], []>} : vector<8x8xbf16>, vector<8x32xbf16>, vector<8x32xf32> -> vector<8x32xf32>
    %6 = vector.broadcast %4 : vector<1x32xf32> to vector<8x32xf32>
    %7 = arith.addf %5, %6 : vector<8x32xf32>
    %cst_4 = arith.constant 0.000000e+00 : f32
    %8 = vector.broadcast %cst_4 : f32 to vector<8x32xf32>
    %9 = arith.maximumf %7, %8 : vector<8x32xf32>
    %10 = arith.truncf %9 : vector<8x32xf32> to vector<8x32xbf16>
    %c16 = arith.constant 16 : index
    %c0_5 = arith.constant 0 : index
    %11 = vector.load %arg2[%c16, %c0_5] : memref<96x128xbf16, #tpu.memory_space<vmem>>, vector<32x32xbf16>
    %c48 = arith.constant 48 : index
    %c0_6 = arith.constant 0 : index
    %12 = vector.load %arg2[%c48, %c0_6] : memref<96x128xbf16, #tpu.memory_space<vmem>>, vector<1x32xbf16>
    %13 = arith.extf %12 : vector<1x32xbf16> to vector<1x32xf32>
    %cst_7 = arith.constant dense<0.000000e+00> : vector<8x32xf32>
    %14 = tpu.matmul %10, %11, %cst_7 {dimension_numbers = #tpu.dot_dimension_numbers<[1], [0], [0], [1], [0, 0, 1, 1], [], []>} : vector<8x32xbf16>, vector<32x32xbf16>, vector<8x32xf32> -> vector<8x32xf32>
    %15 = vector.broadcast %13 : vector<1x32xf32> to vector<8x32xf32>
    %16 = arith.addf %14, %15 : vector<8x32xf32>
    %cst_8 = arith.constant 0.000000e+00 : f32
    %17 = vector.broadcast %cst_8 : f32 to vector<8x32xf32>
    %18 = arith.maximumf %16, %17 : vector<8x32xf32>
    %19 = arith.truncf %18 : vector<8x32xf32> to vector<8x32xbf16>
    %c56 = arith.constant 56 : index
    %c0_9 = arith.constant 0 : index
    %20 = vector.load %arg2[%c56, %c0_9] : memref<96x128xbf16, #tpu.memory_space<vmem>>, vector<32x3xbf16>
    %c88 = arith.constant 88 : index
    %c0_10 = arith.constant 0 : index
    %21 = vector.load %arg2[%c88, %c0_10] : memref<96x128xbf16, #tpu.memory_space<vmem>>, vector<1x3xbf16>
    %22 = arith.extf %21 : vector<1x3xbf16> to vector<1x3xf32>
    %cst_11 = arith.constant dense<0.000000e+00> : vector<8x3xf32>
    %23 = tpu.matmul %19, %20, %cst_11 {dimension_numbers = #tpu.dot_dimension_numbers<[1], [0], [0], [1], [0, 0, 1, 1], [], []>} : vector<8x32xbf16>, vector<32x3xbf16>, vector<8x3xf32> -> vector<8x3xf32>
    %24 = vector.broadcast %22 : vector<1x3xf32> to vector<8x3xf32>
    %25 = arith.addf %23, %24 : vector<8x3xf32>
    %c0_12 = arith.constant 0 : index
    %c0_13 = arith.constant 0 : index
    %26 = vector.load %arg3[%c0_12, %c0_13] : memref<8x3xf32, #tpu.memory_space<vmem>>, vector<8x3xf32>
    tpu.vector_store %arg3[%c0_12, %c0_13], %25 {strides = array<i32>} : memref<8x3xf32, #tpu.memory_space<vmem>>, vector<8x3xf32>,
    return
  }
  func.func @transform_0(%arg0: i32) -> (i32, i32) {
    %c0_i32 = arith.constant 0 : i32
    %c0_i32_0 = arith.constant 0 : i32
    return %arg0, %c0_i32 : i32, i32
  }
  func.func @transform_1(%arg0: i32) -> (i32, i32) {
    %c0_i32 = arith.constant 0 : i32
    %c0_i32_0 = arith.constant 0 : i32
    %c0_i32_1 = arith.constant 0 : i32
    return %c0_i32, %c0_i32_0 : i32, i32
  }
  func.func @transform_2(%arg0: i32) -> (i32, i32) {
    %c0_i32 = arith.constant 0 : i32
    %c0_i32_0 = arith.constant 0 : i32
    return %arg0, %c0_i32 : i32, i32
  }
}

</mosaic_0001>

<llo_original>
// kernel: tpu_custom_call.1
$region0: #{tpu_custom_call.1}
  #allocation0 [shape = 'u32[]', space=smem, size = 0x4, offset = 0x4, fixed_abs, tag = 'smem constant byte address 0x4 - core index']
  #allocation1 [shape = 'u32[72,128]{1,0:T(1,128)}', space=vmem, size = 0x9000, scoped, tag = 'internal scratch']
  %s0 = inlined_call_operand.vmem [shape: f32[20,8], index: 0, kind: input, shape index: {}]
  %s1 = inlined_call_operand.hbm [shape: bf16[96,128], index: 1, kind: input, shape index: {}]
  %s2 = inlined_call_operand.vmem [shape: f32[20,3], index: 2, kind: output, shape index: {}]
  %s3 = sld [smem:[#allocation0]]
  $region45: #{tpu_custom_call.1} parent=0
    _
  %s5 = ssub.s32 1, %s3
  %s6 = scalar_select 0, %s5, %s3
  $region1: #{tpu_custom_call.1} parent=0
    #allocation2 [shape = 'u8[24576]{0}', space=vmem, size = 0x6000, scoped, tag = 'input window, operand 1, single buffered']
    #allocation3 [shape = 's32[2]{0}', space=sflag, size = 0x8, scoped, tag = 'scoped memory for tpu_custom_call.1']
    %7 = vsyncpa [#allocation3], 0
    loop: start=0, step=1, limit=5
    $region2: #{tpu_custom_call.1} parent=1 // loop_pre_header
      _
    $region3: #{tpu_custom_call.1} parent=1 // loop_header
      %s9 = sphi 0, %s13
      %p10 = scmp.ge.s32.totalorder %s9, 5
      %s19 = sphi 0, %s21
      %s22 = sphi 0, %s19
      %s23 = sphi 0, %s22
      %s39 = sphi 0, %s23
      %s43 = sphi 0, %s43
      %s45 = sphi 0, %s43
      %s46 = sphi 0, %s45
      %s60 = sphi 0, %s46
      %s66 = sphi 0, %s68
      %s69 = sphi 0, %s66
      %s70 = sphi 0, %s69
      %s86 = sphi 0, %s70
    $region4: #{tpu_custom_call.1} parent=1 // loop_header_branch
      %12 = sbr.rel (%p10) target = $region8
    $region5: #{tpu_custom_call.1} parent=1 // loop_body
      %s14 = ssub.s32 %s9, 1
      %s15 = ssub.s32 %s9, 2
      %s16 = sadd.s32 %s9, 1
      %s17 = ssub.s32 %s9, %s16
      %p18 = scmp.eq.s32.totalorder %s17, 0
      %s20 = sadd.s32 %s19, 1
      %s21 = scalar_select %p18, %s19, %s20
      %p24 = pneg %p18
      %p25 = scmp.eq.s32.totalorder %s9, 2
      %p26 = por %p24, %p25
      %p27 = scmp.ne.s32.totalorder %s19, %s22
      %p28 = scmp.eq.s32.totalorder %s9, 0
      %p29 = por %p27, %p28
      %p30 = scmp.ne.s32.totalorder %s19, %s22
      %p31 = scmp.eq.s32.totalorder %s14, 2
      %p32 = por %p30, %p31
      %p33 = scmp.ne.s32.totalorder %s22, %s23
      %p34 = scmp.eq.s32.totalorder %s14, 0
      %p35 = por %p33, %p34
      %p36 = scmp.ne.s32.totalorder %s22, %s23
      %p37 = scmp.eq.s32.totalorder %s15, 2
      %p38 = por %p36, %p37
      %p40 = scmp.ne.s32.totalorder %s23, %s39
      %p41 = scmp.eq.s32.totalorder %s15, 0
      %p42 = por %p40, %p41
      %s44 = sadd.s32 %s43, 1
      %p47 = scmp.eq.s32.totalorder %s9, 2
      %p48 = scmp.ne.s32.totalorder %s43, %s45
      %p49 = scmp.eq.s32.totalorder %s9, 0
      %p50 = por %p48, %p49
      %p51 = scmp.ne.s32.totalorder %s43, %s45
      %p52 = scmp.eq.s32.totalorder %s14, 2
      %p53 = por %p51, %p52
      %p54 = scmp.ne.s32.totalorder %s45, %s46
      %p55 = scmp.eq.s32.totalorder %s14, 0
      %p56 = por %p54, %p55
      %p57 = scmp.ne.s32.totalorder %s45, %s46
      %p58 = scmp.eq.s32.totalorder %s15, 2
      %p59 = por %p57, %p58
      %p61 = scmp.ne.s32.totalorder %s46, %s60
      %p62 = scmp.eq.s32.totalorder %s15, 0
      %p63 = por %p61, %p62
      %s64 = ssub.s32 %s9, %s16
      %p65 = scmp.eq.s32.totalorder %s64, 0
      %s67 = sadd.s32 %s66, 1
      %s68 = scalar_select %p65, %s66, %s67
      %p71 = pneg %p65
      %p72 = scmp.eq.s32.totalorder %s9, 2
      %p73 = por %p71, %p72
      %p74 = scmp.ne.s32.totalorder %s66, %s69
      %p75 = scmp.eq.s32.totalorder %s9, 0
      %p76 = por %p74, %p75
      %p77 = scmp.ne.s32.totalorder %s66, %s69
      %p78 = scmp.eq.s32.totalorder %s14, 2
      %p79 = por %p77, %p78
      %p80 = scmp.ne.s32.totalorder %s69, %s70
      %p81 = scmp.eq.s32.totalorder %s14, 0
      %p82 = por %p80, %p81
      %p83 = scmp.ne.s32.totalorder %s69, %s70
      %p84 = scmp.eq.s32.totalorder %s15, 2
      %p85 = por %p83, %p84
      %p87 = scmp.ne.s32.totalorder %s70, %s86
      %p88 = scmp.eq.s32.totalorder %s15, 0
      %p89 = por %p87, %p88
      %p90 = scmp.le.s32.totalorder 1, %s9
      %p91 = scmp.lt.s32.totalorder %s9, 4
      %p92 = pnand %p90, %p91
      %p93 = pneg %p92
      // Predicated region
      $region9: #{tpu_custom_call.1} parent=5 // pred_check
        _
      $region10: #{tpu_custom_call.1} parent=5 // pred_check_branch
        %95 = sbr.rel (%p92) target = $region12
      $region11: #{tpu_custom_call.1} parent=5 // pred_region
        %s96 = ssub.s32 %s9, 1
        // Predicated region
        $region13: #{tpu_custom_call.1} parent=11 // pred_check
          %p97 = pneg %p56
        $region14: #{tpu_custom_call.1} parent=11 // pred_check_branch
          %99 = sbr.rel (%p97) target = $region16
        $region15: #{tpu_custom_call.1} parent=11 // pred_region
          %101 = vsyncadd [#allocation3], 0
          %s102 = sshll.u32 %s1, 4
          %s103 = int_to_ptr.hbm [resolvable:$true] %s102
          %s104 = sshll.u32 [#allocation2], 4
          %s105 = int_to_ptr.vmem [resolvable:$true] %s104
          %110 = dma.hbm_to_vmem [thread:$0]  %s103, 768, %s105, [#allocation3], 64, 64, 4
        $region16: #{tpu_custom_call.1} parent=11 // pred_fallthru
          _
      $region12: #{tpu_custom_call.1} parent=5 // pred_fallthru
        _
      %p111 = scmp.lt.s32.totalorder %s9, 3
      // Predicated region
      $region17: #{tpu_custom_call.1} parent=5 // pred_check
        %p112 = pneg %p111
      $region18: #{tpu_custom_call.1} parent=5 // pred_check_branch
        %114 = sbr.rel (%p112) target = $region20
      $region19: #{tpu_custom_call.1} parent=5 // pred_region
        // Predicated region
        $region21: #{tpu_custom_call.1} parent=19 // pred_check
          %p115 = pneg %p29
        $region22: #{tpu_custom_call.1} parent=19 // pred_check_branch
          %117 = sbr.rel (%p115) target = $region24
        $region23: #{tpu_custom_call.1} parent=19 // pred_region
          %p118 = scmp.lt.s32.totalorder %s9, 2
          %s119 = scalar_select %p118, %s9, 2
          %s120 = smul.addr %s119, 8
          %s121 = scalar_lea.vmem %s0, %s120
        $region24: #{tpu_custom_call.1} parent=19 // pred_fallthru
          _
      $region20: #{tpu_custom_call.1} parent=5 // pred_fallthru
        _
      %p122 = scmp.le.s32.totalorder 1, %s9
      %p123 = scmp.lt.s32.totalorder %s9, 4
      %p124 = pnand %p122, %p123
      %p125 = pneg %p124
      // Predicated region
      $region25: #{tpu_custom_call.1} parent=5 // pred_check
        _
      $region26: #{tpu_custom_call.1} parent=5 // pred_check_branch
        %127 = sbr.rel (%p124) target = $region28
      $region27: #{tpu_custom_call.1} parent=5 // pred_region
        %s128 = ssub.s32 %s9, 1
        // Predicated region
        $region29: #{tpu_custom_call.1} parent=27 // pred_check
          %p129 = pneg %p56
        $region30: #{tpu_custom_call.1} parent=27 // pred_check_branch
          %131 = sbr.rel (%p129) target = $region32
        $region31: #{tpu_custom_call.1} parent=27 // pred_region
          %133 = dma.done [#allocation3], 768
        $region32: #{tpu_custom_call.1} parent=27 // pred_fallthru
          _
        %p134 = scmp.lt.s32.totalorder %s14, 2
        %s135 = scalar_select %p134, %s14, 2
        %s136 = smul.addr %s135, 8
        %s137 = scalar_lea.vmem %s0, %s136
        %p138 = pneg %p35
        %p139 = pneg %p32
        %p140 = pneg %p56
        %p141 = pneg %p53
        %p142 = pneg %p82
        %p143 = pneg %p79
        %p144 = scmp.lt.s32.totalorder %s14, 2
        %s145 = scalar_select %p144, %s14, 2
        %s146 = smul.addr %s145, 8
        %s147 = scalar_lea.vmem %s2, %s146
        %p148 = scmp.lt.s32.totalorder %s14, 2
        %s149 = scalar_select %p148, %s14, 2
        %s150 = smul.addr %s149, 8
        %s151 = scalar_lea.vmem %s0, %s150
        %p152 = scmp.lt.s32.totalorder %s14, 2
        %s153 = scalar_select %p152, %s14, 2
        %s154 = smul.addr %s153, 8
        %s155 = scalar_lea.vmem %s2, %s154
        %v157 = vld [vmem:[%s151] sm:$0xff]
        %v158 = vpack.c.bf16 %v157, %v157
        %v159 = vld [vmem:[#allocation2] sm:$0xf]
        %v160 = vld [vmem:[#allocation2 + $0x4] sm:$0x1]
        %v161 = vunpack.c.l.bf16 %v160
        %v162 = vperm.slane %v161, 0
        %vm163 = vcmask 64512
        %v165 = vsel %vm163, %v158, 0
        %vm167 = vcmask 1043456
        %v169 = vsel %vm167, %v159, 0
        %171 = vmatpush.bf16.msra.mxu0 0
        %172 = vmatpush.bf16.msra.mxu0 0
        %173 = vmatpush.bf16.msra.mxu0 0
        %174 = vmatpush.bf16.msra.mxu0 0
        %175 = vmatpush.bf16.msra.mxu0 0
        %176 = vmatpush.bf16.msra.mxu0 0
        %177 = vmatpush.bf16.msra.mxu0 0
        %178 = vmatpush.bf16.msra.mxu0 %v169
        %179 = vmatmul.bf16.gmra.mxu0 %v165
        %v180 = vpop.f32.mrf.mxu0
        %v181 = vadd.f32 %v162, %v180
        %v182 = vpop.f32.mrf.mxu0
        %183 = vdwg.mxu0
        %v184 = vmax.f32 %v181, 0.0
        %v185 = vpack.c.bf16 %v184, %v184
        %v186 = vld [vmem:[#allocation2 + $0x8] sm:$0xf]
        %v187 = vld [vmem:[#allocation2 + $0xc] sm:$0xf]
        %v188 = vld [vmem:[#allocation2 + $0x10] sm:$0xf]
        %v189 = vld [vmem:[#allocation2 + $0x14] sm:$0xf]
        %v190 = vld [vmem:[#allocation2 + $0x18] sm:$0x1]
        %v191 = vunpack.c.l.bf16 %v190
        %v192 = vperm.slane %v191, 0
        %v197 = vunpack.c.l.b16 %v186
        %v198 = vunpack.c.l.b16 %v187
        %v199 = vunpack.c.l.b16 %v188
        %v200 = vunpack.c.l.b16 %v189
        %v201 = vpack.c.b16 %v198, %v197
        %v202 = vpack.c.b16 %v200, %v199
        %vm205 = vcmask 261120
        %v207 = vsel %vm205, %v185, 0
        %209 = vmatpush.bf16.msra.mxu0 0
        %210 = vmatpush.bf16.msra.mxu0 0
        %211 = vmatpush.bf16.msra.mxu0 0
        %212 = vmatpush.bf16.msra.mxu0 0
        %213 = vmatpush.bf16.msra.mxu0 0
        %214 = vmatpush.bf16.msra.mxu0 0
        %215 = vmatpush.bf16.msra.mxu0 %v202
        %216 = vmatpush.bf16.msra.mxu0 %v201
        %217 = vmatmul.bf16.gmra.mxu0 %v207
        %v218 = vpop.f32.mrf.mxu0
        %v219 = vadd.f32 %v192, %v218
        %v220 = vpop.f32.mrf.mxu0
        %221 = vdwg.mxu0
        %v222 = vmax.f32 %v219, 0.0
        %v223 = vpack.c.bf16 %v222, %v222
        %v224 = vld [vmem:[#allocation2 + $0x1c] sm:$0xf]
        %v225 = vld [vmem:[#allocation2 + $0x20] sm:$0xf]
        %v226 = vld [vmem:[#allocation2 + $0x24] sm:$0xf]
        %v227 = vld [vmem:[#allocation2 + $0x28] sm:$0xf]
        %v228 = vld [vmem:[#allocation2 + $0x2c] sm:$0x1]
        %v229 = vunpack.c.l.bf16 %v228
        %v230 = vperm.slane %v229, 0
        %v235 = vunpack.c.l.b16 %v224
        %v236 = vunpack.c.l.b16 %v225
        %v237 = vunpack.c.l.b16 %v226
        %v238 = vunpack.c.l.b16 %v227
        %v239 = vpack.c.b16 %v236, %v235
        %v240 = vpack.c.b16 %v238, %v237
        %v244 = vsel %vm205, %v223, 0
        %246 = vmatpush.bf16.msra.mxu0 0
        %247 = vmatpush.bf16.msra.mxu0 0
        %248 = vmatpush.bf16.msra.mxu0 0
        %249 = vmatpush.bf16.msra.mxu0 0
        %250 = vmatpush.bf16.msra.mxu0 0
        %251 = vmatpush.bf16.msra.mxu0 0
        %252 = vmatpush.bf16.msra.mxu0 %v240
        %253 = vmatpush.bf16.msra.mxu0 %v239
        %254 = vmatmul.bf16.gmra.mxu0 %v244
        %v255 = vpop.f32.mrf.mxu0
        %v256 = vadd.f32 %v230, %v255
        %v257 = vpop.f32.mrf.mxu0
        %258 = vdwg.mxu0
        %vm259 = vcmask 23552
        %260 = vst.msk [vmem:[%s155] sm:$0xff] %vm259, %v256
        %p261 = scmp.lt.s32.totalorder %s14, 2
        %s262 = scalar_select %p261, %s14, 2
        %s263 = smul.addr %s262, 8
        %s264 = scalar_lea.vmem %s2, %s263
        // Predicated region
        $region33: #{tpu_custom_call.1} parent=27 // pred_check
          %p265 = pneg %p79
        $region34: #{tpu_custom_call.1} parent=27 // pred_check_branch
          %267 = sbr.rel (%p265) target = $region36
        $region35: #{tpu_custom_call.1} parent=27 // pred_region
          _
        $region36: #{tpu_custom_call.1} parent=27 // pred_fallthru
          _
      $region28: #{tpu_custom_call.1} parent=5 // pred_fallthru
        _
      %p268 = scmp.le.s32.totalorder 2, %s9
      // Predicated region
      $region37: #{tpu_custom_call.1} parent=5 // pred_check
        %p269 = pneg %p268
      $region38: #{tpu_custom_call.1} parent=5 // pred_check_branch
        %271 = sbr.rel (%p269) target = $region40
      $region39: #{tpu_custom_call.1} parent=5 // pred_region
        %s272 = ssub.s32 %s9, 2
        // Predicated region
        $region41: #{tpu_custom_call.1} parent=39 // pred_check
          %p273 = pneg %p85
        $region42: #{tpu_custom_call.1} parent=39 // pred_check_branch
          %275 = sbr.rel (%p273) target = $region44
        $region43: #{tpu_custom_call.1} parent=39 // pred_region
          %p276 = scmp.lt.s32.totalorder %s15, 2
          %s277 = scalar_select %p276, %s15, 2
          %s278 = smul.addr %s277, 8
          %s279 = scalar_lea.vmem %s2, %s278
        $region44: #{tpu_custom_call.1} parent=39 // pred_fallthru
          _
      $region40: #{tpu_custom_call.1} parent=5 // pred_fallthru
        _
    $region6: #{tpu_custom_call.1} parent=1 // loop_footer
      %s13 = sadd.s32 1, %s9
    $region7: #{tpu_custom_call.1} parent=1 // loop_footer_branch
      %8 = sbr.rel target = $region3
    $region8: #{tpu_custom_call.1} parent=1 // loop_exit
      _
    %280 = vsyncpa [#allocation3], 1
    %s281 = scalar_lea.sflag [#allocation3], 1
    %282 = vsyncpa %s281, 1

</llo_original>
